<compile_context>
chip_gen: v6e
topology: v6e:2x2x1
jax: 0.10.0
libtpu: 0.0.40
codegen_flags: <defaults>
</compile_context>

<pallas_src>
import math

import jax
import jax.numpy as jnp
from jax.experimental import pallas as pl
from jax.experimental.pallas import tpu as pltpu

_LANE = 128                          # lane width (last dim)
_TARGET_HALF_BLOCK_BYTES = 2 << 20   # ~2 MiB per half-operand per grid step
_MIN_GRID_STEPS = 8                  # keep both v7x TCs busy + deep pipelining


def _glu_kernel(x_ref, o_ref):
    # x_ref block: (kb, 2, tr, 128) -- dim 1 holds [out_half, gate_half].
    # o_ref block: (kb, tr, 128).  Static slices of a VMEM ref are free.
    out = x_ref[:, 0, :, :].astype(jnp.float32)
    gate = x_ref[:, 1, :, :].astype(jnp.float32)
    # sigmoid(g) == 0.5 * tanh(0.5 * g) + 0.5  -> single EUP op (no exp+divide).
    sig = 0.5 * jnp.tanh(0.5 * gate) + 0.5
    o_ref[...] = (out * sig).astype(o_ref.dtype)


def glu(x, dim=1):
    """GLU along `dim`: chunk(2, dim) -> out * sigmoid(gate)."""
    ndim = x.ndim
    dim = dim % ndim
    shape = x.shape
    C = shape[dim]
    assert C % 2 == 0, "split dim must be even for chunk(2)"
    B = math.prod(shape[:dim]) if dim > 0 else 1
    inner = math.prod(shape[dim + 1:]) if dim + 1 < ndim else 1
    M = (C // 2) * inner                     # elems per half per "batch" row
    itemsize = jnp.dtype(x.dtype).itemsize

    # ---- lane-dense view: (B, 2, M) -> (B, 2, r, 128) ----
    r = -(-M // _LANE)
    mp = r * _LANE
    x3 = x.reshape(B, 2, M)                  # contiguous halves -> free reshape
    if mp != M:
        # TODO(synk): lane tail could be masked in-kernel (scalar-prefetched
        # valid count + masked store) to avoid this extra HBM round trip.
        x3 = jnp.pad(x3, ((0, 0), (0, 0), (0, mp - M)))
    x4 = x3.reshape(B, 2, r, _LANE)

    # ---- row tiling: big blocks, but keep >= _MIN_GRID_STEPS grid steps ----
    sublane = max(8, 32 // itemsize)         # 8 (f32) / 16 (bf16) / 32 (int8)
    target_rows = max(
        sublane,
        (_TARGET_HALF_BLOCK_BYTES // (_LANE * itemsize)) // sublane * sublane)
    nb_min = max(1, -(-_MIN_GRID_STEPS // B))
    tr = min(target_rows, -(-r // nb_min))
    tr = max(sublane, (tr // sublane) * sublane)
    if tr >= r:
        tr = r                               # full-dim block (always legal)
    num_row_blocks = -(-r // tr)             # Pallas masks the partial last block

    # ---- batch blocking: group small per-batch slabs into one DMA ----
    kb = 1
    if num_row_blocks == 1:
        kb_by_bytes = max(1, target_rows // max(r, 1))
        kb_by_steps = max(1, B // min(_MIN_GRID_STEPS, B))
        kb = max(1, min(B, kb_by_bytes, kb_by_steps))
    num_batch_blocks = -(-B // kb)

    total = B * M
    out_flat = pl.pallas_call(
        _glu_kernel,
        out_shape=jax.ShapeDtypeStruct((B, r, _LANE), x.dtype),
        grid_spec=pltpu.PrefetchScalarGridSpec(
            num_scalar_prefetch=0,
            grid=(num_batch_blocks, num_row_blocks),
            in_specs=[
                # single fused input: block covers both halves of the split dim
                pl.BlockSpec((kb, 2, tr, _LANE), lambda b, i: (b, 0, i, 0)),
            ],
            out_specs=pl.BlockSpec((kb, tr, _LANE), lambda b, i: (b, i, 0)),
        ),
        compiler_params=pltpu.CompilerParams(
            dimension_semantics=("parallel", "parallel"),
            vmem_limit_bytes=32 * 1024 * 1024,
        ),
        cost_estimate=pl.CostEstimate(
            flops=5 * total,
            transcendentals=total,
            bytes_accessed=3 * total * itemsize,
        ),
    )(x4)

    out = out_flat.reshape(B, mp)
    if mp != M:
        out = out[:, :M]
    return out.reshape(shape[:dim] + (C // 2,) + shape[dim + 1:])


def _reference_glu(x, dim=1):
    out_half, gate_half = jnp.split(x, 2, axis=dim)
    return out_half * jax.nn.sigmoid(gate_half)


if __name__ == "__main__":
    # Small NCHW input matching the conv module: batch=2, channels=4, 16x16.
    x = jax.random.normal(jax.random.PRNGKey(0), (2, 4, 16, 16), dtype=jnp.float32)
    y = glu(x, dim=1)
    jax.block_until_ready(y)
    y_ref = _reference_glu(x, dim=1)
    assert y.shape == y_ref.shape
    assert jnp.allclose(y, y_ref, atol=1e-5, rtol=1e-5)

    # Lane-tail path (per-half size not a multiple of 128).
    x2 = jax.random.normal(jax.random.PRNGKey(1), (1, 6, 7, 5), dtype=jnp.float32)
    y2 = glu(x2, dim=1)
    jax.block_until_ready(y2)
    y2_ref = _reference_glu(x2, dim=1)
    assert y2.shape == y2_ref.shape
    assert jnp.allclose(y2, y2_ref, atol=1e-5, rtol=1e-5)

    # bf16 I/O path (model dtype preserved end to end).
    x3 = jax.random.normal(jax.random.PRNGKey(2), (2, 8, 16, 16), dtype=jnp.bfloat16)
    y3 = glu(x3, dim=1)
    jax.block_until_ready(y3)
    y3_ref = _reference_glu(x3.astype(jnp.float32), dim=1)
    assert y3.shape == y3_ref.shape
    assert jnp.allclose(y3.astype(jnp.float32), y3_ref, atol=2e-2, rtol=2e-2)

    print("KERNEL_OK")
</pallas_src>

<mosaic_0001>
module attributes {stable_mosaic.version = 11 : i64} {
  func.func @_glu_kernel(%arg0: i32, %arg1: i32, %arg2: memref<1x2x4x128xf32, #tpu.memory_space<vmem>>, %arg3: memref<1x4x128xf32, #tpu.memory_space<vmem>>) attributes {dimension_semantics = [#tpu.dimension_semantics<parallel>, #tpu.dimension_semantics<parallel>], iteration_bounds = array<i64: 2, 1>, scalar_prefetch = 0 : i64, scratch_operands = 0 : i64, tpu.core_type = #tpu.core_type<tc>, window_params = [{transform_indices = @transform_0, window_bounds = array<i64: 1, 2, 4, 128>}, {transform_indices = @transform_1, window_bounds = array<i64: 1, 4, 128>}]} {
    %c0 = arith.constant 0 : index
    %c0_0 = arith.constant 0 : index
    %c0_1 = arith.constant 0 : index
    %c0_2 = arith.constant 0 : index
    %0 = vector.load %arg2[%c0, %c0_0, %c0_1, %c0_2] : memref<1x2x4x128xf32, #tpu.memory_space<vmem>>, vector<1x1x4x128xf32>
    %1 = vector.shape_cast %0 : vector<1x1x4x128xf32> to vector<1x4x128xf32>
    %c0_3 = arith.constant 0 : index
    %c1 = arith.constant 1 : index
    %c0_4 = arith.constant 0 : index
    %c0_5 = arith.constant 0 : index
    %2 = vector.load %arg2[%c0_3, %c1, %c0_4, %c0_5] : memref<1x2x4x128xf32, #tpu.memory_space<vmem>>, vector<1x1x4x128xf32>
    %3 = vector.shape_cast %2 : vector<1x1x4x128xf32> to vector<1x4x128xf32>
    %cst = arith.constant 5.000000e-01 : f32
    %4 = vector.broadcast %cst : f32 to vector<1x4x128xf32>
    %5 = arith.mulf %4, %3 : vector<1x4x128xf32>
    %6 = math.tanh %5 : vector<1x4x128xf32>
    %cst_6 = arith.constant 5.000000e-01 : f32
    %7 = vector.broadcast %cst_6 : f32 to vector<1x4x128xf32>
    %8 = arith.mulf %7, %6 : vector<1x4x128xf32>
    %cst_7 = arith.constant 5.000000e-01 : f32
    %9 = vector.broadcast %cst_7 : f32 to vector<1x4x128xf32>
    %10 = arith.addf %8, %9 : vector<1x4x128xf32>
    %11 = arith.mulf %1, %10 : vector<1x4x128xf32>
    %c0_8 = arith.constant 0 : index
    %c0_9 = arith.constant 0 : index
    %c0_10 = arith.constant 0 : index
    %12 = vector.load %arg3[%c0_8, %c0_9, %c0_10] : memref<1x4x128xf32, #tpu.memory_space<vmem>>, vector<1x4x128xf32>
    tpu.vector_store %arg3[%c0_8, %c0_9, %c0_10], %11 {strides = array<i32>} : memref<1x4x128xf32, #tpu.memory_space<vmem>>, vector<1x4x128xf32>,
    return
  }
  func.func @transform_0(%arg0: i32, %arg1: i32) -> (i32, i32, i32, i32) {
    %c0_i32 = arith.constant 0 : i32
    %c0_i32_0 = arith.constant 0 : i32
    %c0_i32_1 = arith.constant 0 : i32
    return %arg0, %c0_i32, %arg1, %c0_i32_0 : i32, i32, i32, i32
  }
  func.func @transform_1(%arg0: i32, %arg1: i32) -> (i32, i32, i32) {
    %c0_i32 = arith.constant 0 : i32
    %c0_i32_0 = arith.constant 0 : i32
    return %arg0, %arg1, %c0_i32 : i32, i32, i32
  }
}

</mosaic_0001>

<llo_original>
// kernel: tpu_custom_call.1
$region0: #{tpu_custom_call.1}
  #allocation0 [shape = 'u32[]', space=smem, size = 0x4, offset = 0x4, fixed_abs, tag = 'smem constant byte address 0x4 - core index']
  #allocation1 [shape = 'u32[144,128]{1,0:T(1,128)}', space=vmem, size = 0x12000, scoped, tag = 'internal scratch']
  %s0 = inlined_call_operand.hbm [shape: f32[2,2,4,128], index: 0, kind: input, shape index: {}]
  %s1 = inlined_call_operand.hbm [shape: f32[2,4,128], index: 1, kind: output, shape index: {}]
  %s2 = sld [smem:[#allocation0]]
  $region41: #{tpu_custom_call.1} parent=0
    _
  %s4 = ssub.s32 1, %s2
  %s5 = scalar_select 0, %s4, %s2
  $region1: #{tpu_custom_call.1} parent=0
    #allocation2 [shape = 'u8[8192]{0}', space=vmem, size = 0x2000, scoped, tag = 'input window, operand 0']
    #allocation3 [shape = 's32[2]{0}', space=sflag, size = 0x8, scoped, tag = 'scoped memory for tpu_custom_call.1']
    #allocation4 [shape = 's32[2]{0}', space=sflag, size = 0x8, scoped, tag = 'scoped memory for tpu_custom_call.1']
    #allocation5 [shape = 'u8[4096]{0}', space=vmem, size = 0x1000, scoped, tag = 'output window, operand 0']
    %6 = vsyncpa [#allocation3], 0
    %s7 = scalar_lea.sflag [#allocation3], 1
    %8 = vsyncpa %s7, 0
    %9 = vsyncpa [#allocation4], 0
    %s10 = scalar_lea.sflag [#allocation4], 1
    %11 = vsyncpa %s10, 0
    loop: start=0, step=1, limit=4
    $region2: #{tpu_custom_call.1} parent=1 // loop_pre_header
      _
    $region3: #{tpu_custom_call.1} parent=1 // loop_header
      %s13 = sphi 0, %s17
      %p14 = scmp.ge.s32.totalorder %s13, 4
      %s20 = sphi 0, %s32
      %s21 = sphi 0, %s28
      %s22 = sphi 0, %s20
      %s23 = sphi 0, %s21
      %s24 = sphi 0, %s22
      %s25 = sphi 0, %s23
      %s37 = sphi 0, %s39
      %s40 = sphi 0, %s37
      %s41 = sphi 0, %s40
      %s57 = sphi 0, %s41
      %s65 = sphi 0, %s67
      %s68 = sphi 0, %s65
      %s69 = sphi 0, %s68
      %s85 = sphi 0, %s69
    $region4: #{tpu_custom_call.1} parent=1 // loop_header_branch
      %16 = sbr.rel (%p14) target = $region8
    $region5: #{tpu_custom_call.1} parent=1 // loop_body
      %s18 = ssub.s32 %s13, 1
      %s19 = ssub.s32 %s13, 2
      %s26 = sadd.s32 1, %s21
      %p27 = scmp.ge.s32.totalorder %s26, 1
      %s28 = scalar_select %p27, 0, %s26
      %s29 = sadd.s32 1, %s20
      %s30 = scalar_select %p27, %s29, %s20
      %p31 = scmp.ge.s32.totalorder %s30, 2
      %s32 = scalar_select %p31, 0, %s30
      %s33 = ssub.s32 %s20, %s32
      %s34 = ssub.s32 %s21, %s28
      %s35 = sor.u32 %s33, %s34
      %p36 = scmp.eq.s32.totalorder %s35, 0
      %s38 = sadd.s32 %s37, 1
      %s39 = scalar_select %p36, %s37, %s38
      %p42 = pneg %p36
      %p43 = scmp.eq.s32.totalorder %s13, 1
      %p44 = por %p42, %p43
      %p45 = scmp.ne.s32.totalorder %s37, %s40
      %p46 = scmp.eq.s32.totalorder %s13, 0
      %p47 = por %p45, %p46
      %p48 = scmp.ne.s32.totalorder %s37, %s40
      %p49 = scmp.eq.s32.totalorder %s18, 1
      %p50 = por %p48, %p49
      %p51 = scmp.ne.s32.totalorder %s40, %s41
      %p52 = scmp.eq.s32.totalorder %s18, 0
      %p53 = por %p51, %p52
      %p54 = scmp.ne.s32.totalorder %s40, %s41
      %p55 = scmp.eq.s32.totalorder %s19, 1
      %p56 = por %p54, %p55
      %p58 = scmp.ne.s32.totalorder %s41, %s57
      %p59 = scmp.eq.s32.totalorder %s19, 0
      %p60 = por %p58, %p59
      %s61 = ssub.s32 %s20, %s32
      %s62 = ssub.s32 %s21, %s28
      %s63 = sor.u32 %s61, %s62
      %p64 = scmp.eq.s32.totalorder %s63, 0
      %s66 = sadd.s32 %s65, 1
      %s67 = scalar_select %p64, %s65, %s66
      %p70 = pneg %p64
      %p71 = scmp.eq.s32.totalorder %s13, 1
      %p72 = por %p70, %p71
      %p73 = scmp.ne.s32.totalorder %s65, %s68
      %p74 = scmp.eq.s32.totalorder %s13, 0
      %p75 = por %p73, %p74
      %p76 = scmp.ne.s32.totalorder %s65, %s68
      %p77 = scmp.eq.s32.totalorder %s18, 1
      %p78 = por %p76, %p77
      %p79 = scmp.ne.s32.totalorder %s68, %s69
      %p80 = scmp.eq.s32.totalorder %s18, 0
      %p81 = por %p79, %p80
      %p82 = scmp.ne.s32.totalorder %s68, %s69
      %p83 = scmp.eq.s32.totalorder %s19, 1
      %p84 = por %p82, %p83
      %p86 = scmp.ne.s32.totalorder %s69, %s85
      %p87 = scmp.eq.s32.totalorder %s19, 0
      %p88 = por %p86, %p87
      %p89 = scmp.le.s32.totalorder 1, %s13
      %p90 = scmp.lt.s32.totalorder %s13, 3
      %p91 = pnand %p89, %p90
      %p92 = pneg %p91
      // Predicated region
      $region9: #{tpu_custom_call.1} parent=5 // pred_check
        _
      $region10: #{tpu_custom_call.1} parent=5 // pred_check_branch
        %94 = sbr.rel (%p91) target = $region12
      $region11: #{tpu_custom_call.1} parent=5 // pred_region
        %s95 = ssub.s32 %s13, 1
      $region12: #{tpu_custom_call.1} parent=5 // pred_fallthru
        _
      %p96 = scmp.lt.s32.totalorder %s13, 2
      // Predicated region
      $region13: #{tpu_custom_call.1} parent=5 // pred_check
        %p97 = pneg %p96
      $region14: #{tpu_custom_call.1} parent=5 // pred_check_branch
        %99 = sbr.rel (%p97) target = $region16
      $region15: #{tpu_custom_call.1} parent=5 // pred_region
        // Predicated region
        $region17: #{tpu_custom_call.1} parent=15 // pred_check
          %p100 = pneg %p47
        $region18: #{tpu_custom_call.1} parent=15 // pred_check_branch
          %102 = sbr.rel (%p100) target = $region20
        $region19: #{tpu_custom_call.1} parent=15 // pred_region
          %s103 = sand.u32 %s37, 1
          %s104 = scalar_lea.sflag [#allocation3], %s103
          %s105 = sand.u32 %s37, 1
          %s106 = smul.addr %s105, 8
          %s107 = scalar_lea.vmem [#allocation2], %s106
          %s109 = ssub.s32 128, 128
          %110 = vsyncadd %s104, %s109
          %s111 = smul.addr %s20, 2
          %s112 = sadd.s32 %s21, %s111
          %s113 = smul.addr %s112, 64
          %s114 = scalar_lea.hbm %s0, %s113
          %s115 = sshll.u32 %s107, 4
          %s116 = int_to_ptr.vmem [resolvable:$true] %s115
          %121 = dma.hbm_to_vmem [thread:$0]  %s114, 128, %s116, %s104, 64, 64, 4
        $region20: #{tpu_custom_call.1} parent=15 // pred_fallthru
          _
      $region16: #{tpu_custom_call.1} parent=5 // pred_fallthru
        _
      %p122 = scmp.le.s32.totalorder 1, %s13
      %p123 = scmp.lt.s32.totalorder %s13, 3
      %p124 = pnand %p122, %p123
      %p125 = pneg %p124
      // Predicated region
      $region21: #{tpu_custom_call.1} parent=5 // pred_check
        _
      $region22: #{tpu_custom_call.1} parent=5 // pred_check_branch
        %127 = sbr.rel (%p124) target = $region24
      $region23: #{tpu_custom_call.1} parent=5 // pred_region
        %s128 = ssub.s32 %s13, 1
        %s129 = sand.u32 %s40, 1
        %s130 = scalar_lea.sflag [#allocation3], %s129
        %s131 = sand.u32 %s40, 1
        %s132 = smul.addr %s131, 8
        %s133 = scalar_lea.vmem [#allocation2], %s132
        // Predicated region
        $region25: #{tpu_custom_call.1} parent=23 // pred_check
          %p134 = pneg %p53
        $region26: #{tpu_custom_call.1} parent=23 // pred_check_branch
          %136 = sbr.rel (%p134) target = $region28
        $region27: #{tpu_custom_call.1} parent=23 // pred_region
          %137 = dma.done %s130, 128
        $region28: #{tpu_custom_call.1} parent=23 // pred_fallthru
          _
        %s138 = sand.u32 %s40, 1
        %s139 = scalar_lea.sflag [#allocation3], %s138
        %s140 = sand.u32 %s40, 1
        %s141 = smul.addr %s140, 8
        %s142 = scalar_lea.vmem [#allocation2], %s141
        %p143 = pneg %p53
        %p144 = pneg %p50
        %p145 = pneg %p81
        %p146 = pneg %p78
        %s147 = sand.u32 %s68, 1
        %s148 = scalar_lea.sflag [#allocation4], %s147
        %s149 = sand.u32 %s68, 1
        %s150 = smul.addr %s149, 4
        %s151 = scalar_lea.vmem [#allocation5], %s150
        %v152 = vld [vmem:[%s133] sm:$0xf]
        %s153 = scalar_lea.vmem %s133, 4 [#allocation2]
        %v154 = vld [vmem:[%s153] sm:$0xf]
        %v155 = vmul.f32 %v154, 0.5
        %v156 = vtanh.pop %v155
        %v157 = vmul.f32 %v156, 0.5
        %v158 = vadd.f32 %v157, 0.5
        %v159 = vmul.f32 %v152, %v158
        %160 = vst [vmem:[%s151] sm:$0xf] %v159
        %s161 = sand.u32 %s68, 1
        %s162 = scalar_lea.sflag [#allocation4], %s161
        %s163 = sand.u32 %s68, 1
        %s164 = smul.addr %s163, 4
        %s165 = scalar_lea.vmem [#allocation5], %s164
        // Predicated region
        $region29: #{tpu_custom_call.1} parent=23 // pred_check
          %p166 = pneg %p78
        $region30: #{tpu_custom_call.1} parent=23 // pred_check_branch
          %168 = sbr.rel (%p166) target = $region32
        $region31: #{tpu_custom_call.1} parent=23 // pred_region
          %s170 = ssub.s32 64, 64
          %171 = vsyncadd %s162, %s170
          %s172 = sadd.s32 %s23, %s22
          %s173 = smul.addr %s172, 64
          %s174 = scalar_lea.hbm %s1, %s173
          %s176 = sshll.u32 %s165, 4
          %s177 = int_to_ptr.vmem [resolvable:$true] %s176
          %179 = dma.vmem_to_hbm [thread:$0]  %s177, 64, %s174, %s162
        $region32: #{tpu_custom_call.1} parent=23 // pred_fallthru
          _
      $region24: #{tpu_custom_call.1} parent=5 // pred_fallthru
        _
      %p180 = scmp.le.s32.totalorder 2, %s13
      // Predicated region
      $region33: #{tpu_custom_call.1} parent=5 // pred_check
        %p181 = pneg %p180
      $region34: #{tpu_custom_call.1} parent=5 // pred_check_branch
        %183 = sbr.rel (%p181) target = $region36
      $region35: #{tpu_custom_call.1} parent=5 // pred_region
        %s184 = ssub.s32 %s13, 2
        // Predicated region
        $region37: #{tpu_custom_call.1} parent=35 // pred_check
          %p185 = pneg %p84
        $region38: #{tpu_custom_call.1} parent=35 // pred_check_branch
          %187 = sbr.rel (%p185) target = $region40
        $region39: #{tpu_custom_call.1} parent=35 // pred_region
          %s188 = sand.u32 %s69, 1
          %s189 = scalar_lea.sflag [#allocation4], %s188
          %s190 = sand.u32 %s69, 1
          %s191 = smul.addr %s190, 4
          %s192 = scalar_lea.vmem [#allocation5], %s191
          %193 = dma.done %s189, 64
        $region40: #{tpu_custom_call.1} parent=35 // pred_fallthru
          _
      $region36: #{tpu_custom_call.1} parent=5 // pred_fallthru
        _
    $region6: #{tpu_custom_call.1} parent=1 // loop_footer
      %s17 = sadd.s32 1, %s13
    $region7: #{tpu_custom_call.1} parent=1 // loop_footer_branch
      %12 = sbr.rel target = $region3
    $region8: #{tpu_custom_call.1} parent=1 // loop_exit
      _
    %194 = vsyncpa [#allocation3], 1
    %s195 = scalar_lea.sflag [#allocation3], 1
    %196 = vsyncpa %s195, 1
    %197 = vsyncpa [#allocation4], 1
    %s198 = scalar_lea.sflag [#allocation4], 1
    %199 = vsyncpa %s198, 1

</llo_original>
